<compile_context>
chip_gen: v7x
topology: tpu7x:2x2x1
jax: 0.10.0
libtpu: 0.0.40
codegen_flags: <defaults>
</compile_context>

<pallas_src>
import functools

import numpy as np
import jax
import jax.numpy as jnp
from jax.experimental import pallas as pl
from jax.experimental.pallas import tpu as pltpu


# ----------------------------------------------------------------------------
# Tiny probe kernel: detect pltpu.roll's direction convention at runtime so the
# im2col shifts are direction-proof. (Run once, outside any jit.)
# ----------------------------------------------------------------------------
@functools.lru_cache(maxsize=None)
def _roll_is_numpy_style():
    def k(x_ref, o_ref):
        o_ref[...] = pltpu.roll(x_ref[...], 1, axis=1)

    x = jax.lax.broadcasted_iota(jnp.float32, (8, 128), 1)
    y = pl.pallas_call(k, out_shape=jax.ShapeDtypeStruct((8, 128), jnp.float32))(x)
    v = float(y[0, 0])
    if v == 127.0:      # out[i] = x[i - shift]  (numpy convention)
        return True
    if v == 1.0:        # out[i] = x[i + shift]
        return False
    raise RuntimeError(f"unexpected pltpu.roll behaviour (probe value {v})")


# ----------------------------------------------------------------------------
# The fused UpBlock kernel. One batch element per grid step.
# Activations are (C, H*W) f32 values; weights arrive pre-packed in bf16.
# ----------------------------------------------------------------------------
def _upblock_kernel(x_ref,
                    wh_ref, bh_ref,          # head 1x1
                    w1_ref, b1_ref,          # res_head conv1 (3x3)
                    w2_ref, b2_ref,          # res_head conv2 (3x3)
                    wm_ref, bm_ref,          # mid (3x3)
                    wu_ref, bu_ref,          # up 1x1 (phase-major channels)
                    e_ref,                   # PixelShuffle permutation matrix
                    w3_ref, b3_ref,          # res_tail conv1 (3x3)
                    w4_ref, b4_ref,          # res_tail conv2 (3x3)
                    wt_ref, bt_ref,          # conv_tail (3x3)
                    o_ref,
                    *, H, W, F, np_roll):
    f32 = jnp.float32
    bf16 = jnp.bfloat16

    def conv1x1(act, w_r, b_r):
        # (Co, Cin) @ (Cin, HW) -> (Co, HW), bf16 operands / f32 accumulate.
        return (jnp.dot(w_r[...], act.astype(bf16),
                        preferred_element_type=f32) + b_r[...])

    def conv3x3(act, w_r, b_r, h, w):
        # Same-padded 3x3 conv as a single im2col matmul.
        c, hw = act.shape
        lw = w.bit_length() - 1                      # w is a power of two
        q = jax.lax.broadcasted_iota(jnp.int32, (1, hw), 1)
        xq = jnp.bitwise_and(q, w - 1)               # q % w
        yq = jnp.right_shift(q, lw)                  # q // w
        blocks = []
        for dy in (-1, 0, 1):
            for dx in (-1, 0, 1):
                s = dy * w + dx                      # want block[i] = act[i + s]
                if s == 0:
                    shifted = act
                else:
                    amt = (-s) % hw if np_roll else s % hw
                    shifted = pltpu.roll(act, amt, axis=1)
                valid = ((yq >= -dy) & (yq < h - dy) &
                         (xq >= -dx) & (xq < w - dx))
                blocks.append(jnp.where(valid, shifted, 0.0))
        patches = jnp.concatenate(blocks, axis=0).astype(bf16)   # (9*c, hw)
        return (jnp.dot(w_r[...], patches, preferred_element_type=f32)
                + b_r[...])

    x = x_ref[...].astype(f32)                       # (Cin0, H*W)

    # o1 = conv_head(x)                               (1x1)
    o1 = conv1x1(x, wh_ref, bh_ref)                  # (F, H*W)
    # res_head: conv3x3 -> relu -> conv3x3 -> + o1
    t = jnp.maximum(conv3x3(o1, w1_ref, b1_ref, H, W), 0.0)
    o2 = conv3x3(t, w2_ref, b2_ref, H, W) + o1
    # mid conv3x3, with the (o3 + o1) skip fused into its output
    z = conv3x3(o2, wm_ref, bm_ref, H, W) + o1
    # up 1x1 conv with phase-major output channels, then PixelShuffle(2) as a
    # permutation matmul: sr[c, q] = up[c*4 + 2i + j, p(q)]
    upp = conv1x1(z, wu_ref, bu_ref)                 # (4F, H*W)
    up_cat = jnp.concatenate(
        [upp[0:F], upp[F:2 * F], upp[2 * F:3 * F], upp[3 * F:4 * F]],
        axis=1)                                      # (F, 4*H*W)
    sr = jnp.dot(up_cat.astype(bf16), e_ref[...],
                 preferred_element_type=f32)         # (F, (2H)*(2W))
    H2, W2 = 2 * H, 2 * W
    # res_tail: conv3x3 -> relu -> conv3x3 -> + sr
    t2 = jnp.maximum(conv3x3(sr, w3_ref, b3_ref, H2, W2), 0.0)
    o3b = conv3x3(t2, w4_ref, b4_ref, H2, W2) + sr
    # conv_tail(3x3) + sr
    out = conv3x3(o3b, wt_ref, bt_ref, H2, W2) + sr
    o_ref[...] = out.astype(o_ref.dtype)


# ----------------------------------------------------------------------------
# Host-side weight packing.
# ----------------------------------------------------------------------------
def _pack_conv3(w):
    # HWIO (3,3,Cin,Co) -> (Co, 9*Cin) bf16, row-major over (kh, kw, cin).
    K1, K2, Cin, Co = w.shape
    assert K1 == 3 and K2 == 3
    return jnp.asarray(w.reshape(K1 * K2 * Cin, Co).T, dtype=jnp.bfloat16)


def _pack_conv1(w):
    # HWIO (1,1,Cin,Co) -> (Co, Cin) bf16.
    return jnp.asarray(w[0, 0].T, dtype=jnp.bfloat16)


def _pack_bias(b):
    return jnp.asarray(b, jnp.float32).reshape(-1, 1)


def _pack_up(w, b, F):
    # Up conv weights reordered so rows are (ij*F + c) instead of (c*4 + ij),
    # matching the PixelShuffle phase layout used by the permutation matmul.
    wu_t = np.asarray(w[0, 0]).T                     # (4F, F): [co, cin]
    m = np.arange(4 * F)
    old = (m % F) * 4 + (m // F)                     # co = c*4 + (2i + j)
    w_perm = jnp.asarray(wu_t[old], jnp.bfloat16)    # (4F, F)
    b_perm = jnp.asarray(np.asarray(b)[old], jnp.float32).reshape(-1, 1)
    return w_perm, b_perm


def _shuffle_matrix(H, W, r=2):
    # E[ij*HW + p, q] = 1 iff q = (r*y+i)*(r*W) + (r*x+j) with p = y*W + x.
    HW = H * W
    E = np.zeros((r * r * HW, r * r * HW), np.float32)
    p = np.arange(HW)
    y, x = p // W, p % W
    for i in range(r):
        for j in range(r):
            q = (r * y + i) * (r * W) + (r * x + j)
            E[(i * r + j) * HW + p, q] = 1.0
    return jnp.asarray(E, jnp.bfloat16)


# ----------------------------------------------------------------------------
# Fused forward pass (NCHW in / NCHW out, like the PyTorch module).
# ----------------------------------------------------------------------------
def upblock_forward(x_nchw, params):
    N, Cin0, H, W = x_nchw.shape
    F = params["rh1_w"].shape[-1]
    assert W & (W - 1) == 0, "W must be a power of two (in-kernel index math)"
    HW = H * W
    HW2 = 4 * HW

    x_flat = x_nchw.reshape(N, Cin0, HW)

    wh = _pack_conv1(params["head_w"]); bh = _pack_bias(params["head_b"])
    w1 = _pack_conv3(params["rh1_w"]);  b1 = _pack_bias(params["rh1_b"])
    w2 = _pack_conv3(params["rh2_w"]);  b2 = _pack_bias(params["rh2_b"])
    wm = _pack_conv3(params["mid_w"]);  bm = _pack_bias(params["mid_b"])
    wu, bu = _pack_up(params["up_w"], params["up_b"], F)
    E = _shuffle_matrix(H, W, 2)
    w3 = _pack_conv3(params["rt1_w"]);  b3 = _pack_bias(params["rt1_b"])
    w4 = _pack_conv3(params["rt2_w"]);  b4 = _pack_bias(params["rt2_b"])
    wt = _pack_conv3(params["tail_w"]); bt = _pack_bias(params["tail_b"])

    consts = [wh, bh, w1, b1, w2, b2, wm, bm, wu, bu, E,
              w3, b3, w4, b4, wt, bt]

    kernel = functools.partial(
        _upblock_kernel, H=H, W=W, F=F, np_roll=_roll_is_numpy_style())

    in_specs = [pl.BlockSpec((pl.Squeezed(), Cin0, HW), lambda n: (n, 0, 0))]
    in_specs += [pl.BlockSpec(c.shape, lambda n: (0, 0)) for c in consts]

    out = pl.pallas_call(
        kernel,
        out_shape=jax.ShapeDtypeStruct((N, F, HW2), jnp.float32),
        grid=(N,),
        in_specs=in_specs,
        out_specs=pl.BlockSpec((pl.Squeezed(), F, HW2), lambda n: (n, 0, 0)),
        compiler_params=pltpu.CompilerParams(
            dimension_semantics=("parallel",)),
    )(x_flat, *consts)

    return out.reshape(N, F, 2 * H, 2 * W)


# ----------------------------------------------------------------------------
# Pure-JAX f32 reference (NCHW) for the correctness check.
# ----------------------------------------------------------------------------
def _conv_ref(x, w, b):
    pad = w.shape[0] // 2
    y = jax.lax.conv_general_dilated(
        x, w, (1, 1), ((pad, pad), (pad, pad)),
        dimension_numbers=("NCHW", "HWIO", "NCHW"))
    return y + b.reshape(1, -1, 1, 1)


def _pixel_shuffle_nchw(x, r):
    N, C, H, W = x.shape
    c = C // (r * r)
    x = x.reshape(N, c, r, r, H, W)
    x = jnp.transpose(x, (0, 1, 4, 2, 5, 3))
    return x.reshape(N, c, H * r, W * r)


def upblock_ref(x, p):
    o1 = _conv_ref(x, p["head_w"], p["head_b"])
    t = jax.nn.relu(_conv_ref(o1, p["rh1_w"], p["rh1_b"]))
    o2 = _conv_ref(t, p["rh2_w"], p["rh2_b"]) + o1
    o3 = _conv_ref(o2, p["mid_w"], p["mid_b"])
    sr = _pixel_shuffle_nchw(_conv_ref(o3 + o1, p["up_w"], p["up_b"]), 2)
    t2 = jax.nn.relu(_conv_ref(sr, p["rt1_w"], p["rt1_b"]))
    o3b = _conv_ref(t2, p["rt2_w"], p["rt2_b"]) + sr
    return _conv_ref(o3b, p["tail_w"], p["tail_b"]) + sr


# ----------------------------------------------------------------------------
# Deterministic parameter init and driver.
# ----------------------------------------------------------------------------
def init_params(key, in_ch, n_feats, kernel_size=3):
    def conv_params(k, kh, cin, cout):
        kw_, kb_ = jax.random.split(k)
        w = 0.05 * jax.random.normal(kw_, (kh, kh, cin, cout), jnp.float32)
        b = 0.01 * jax.random.normal(kb_, (cout,), jnp.float32)
        return w, b

    keys = jax.random.split(key, 8)
    p = {}
    p["head_w"], p["head_b"] = conv_params(keys[0], 1, in_ch, n_feats)
    p["rh1_w"], p["rh1_b"] = conv_params(keys[1], kernel_size, n_feats, n_feats)
    p["rh2_w"], p["rh2_b"] = conv_params(keys[2], kernel_size, n_feats, n_feats)
    p["mid_w"], p["mid_b"] = conv_params(keys[3], kernel_size, n_feats, n_feats)
    p["up_w"], p["up_b"] = conv_params(keys[4], 1, n_feats, n_feats * 4)
    p["rt1_w"], p["rt1_b"] = conv_params(keys[5], kernel_size, n_feats, n_feats)
    p["rt2_w"], p["rt2_b"] = conv_params(keys[6], kernel_size, n_feats, n_feats)
    p["tail_w"], p["tail_b"] = conv_params(keys[7], 3, n_feats, n_feats)
    return p


if __name__ == "__main__":
    key = jax.random.PRNGKey(0)
    k_x, k_p = jax.random.split(key)

    # Shapes consistent with the module: batch=2, in_ch=4, n_feats=8, 16x16.
    N, in_ch, H, W = 2, 4, 16, 16
    n_feats = 8

    x = jax.random.normal(k_x, (N, in_ch, H, W), jnp.float32)   # NCHW (PyTorch)
    params = init_params(k_p, in_ch, n_feats)

    out = jax.block_until_ready(upblock_forward(x, params))     # (N, F, 2H, 2W)
    ref = jax.block_until_ready(upblock_ref(x, params))

    assert out.shape == (N, n_feats, 2 * H, 2 * W), out.shape
    # bf16 MXU operands vs f32 reference -> loosened, scale-normalized check.
    err = float(jnp.max(jnp.abs(out - ref)) / (jnp.max(jnp.abs(ref)) + 1e-6))
    assert err < 5e-2, f"mismatch vs reference: normalized max err {err:.3e}"

    print("KERNEL_OK")
</pallas_src>

<mosaic_0001>
module attributes {stable_mosaic.version = 11 : i64} {
  func.func @k(%arg0: memref<8x128xf32, #tpu.memory_space<vmem>>, %arg1: memref<8x128xf32, #tpu.memory_space<vmem>>) attributes {dimension_semantics = [], scalar_prefetch = 0 : i64, scratch_operands = 0 : i64, tpu.core_type = #tpu.core_type<tc>} {
    %c0 = arith.constant 0 : index
    %c0_0 = arith.constant 0 : index
    %0 = vector.load %arg0[%c0, %c0_0] : memref<8x128xf32, #tpu.memory_space<vmem>>, vector<8x128xf32>
    %c1_i32 = arith.constant 1 : i32
    %1 = tpu.dynamic_rotate %0 by %c1_i32 dim 1 : vector<8x128xf32>, i32 -> vector<8x128xf32>
    %c0_1 = arith.constant 0 : index
    %c0_2 = arith.constant 0 : index
    %2 = vector.load %arg1[%c0_1, %c0_2] : memref<8x128xf32, #tpu.memory_space<vmem>>, vector<8x128xf32>
    tpu.vector_store %arg1[%c0_1, %c0_2], %1 {strides = array<i32>} : memref<8x128xf32, #tpu.memory_space<vmem>>, vector<8x128xf32>,
    return
  }
}

</mosaic_0001>

<llo_original>
// kernel: tpu_custom_call.1
$region0: #{tpu_custom_call.1}
  #allocation0 [shape = 'u32[]', space=smem, size = 0x4, offset = 0x4, fixed_abs, tag = 'smem constant byte address 0x4 - core index']
  #allocation1 [shape = 'u32[144,128]{1,0:T(1,128)}', space=vmem, size = 0x12000, scoped, tag = 'internal scratch']
  %s0 = inlined_call_operand.hbm [shape: f32[8,128], index: 0, kind: input, shape index: {}]
  %s1 = inlined_call_operand.hbm [shape: f32[8,128], index: 1, kind: output, shape index: {}]
  %s2 = sld [smem:[#allocation0]]
  $region18: #{tpu_custom_call.1} parent=0
    _
  %s4 = ssub.s32 1, %s2
  %s5 = scalar_select 0, %s4, %s2
  $region1: #{tpu_custom_call.1} parent=0
    #allocation2 [shape = 'u8[4096]{0}', space=vmem, size = 0x1000, scoped, tag = 'input window, operand 0, single buffered']
    #allocation3 [shape = 's32[1]{0}', space=sflag, size = 0x4, scoped, tag = 'scoped memory for tpu_custom_call.1']
    #allocation4 [shape = 's32[1]{0}', space=sflag, size = 0x4, scoped, tag = 'scoped memory for tpu_custom_call.1']
    #allocation5 [shape = 'u8[4096]{0}', space=vmem, size = 0x1000, scoped, tag = 'output window, operand 0, single buffered']
    %6 = vsyncpa [#allocation3], 0
    %7 = vsyncpa [#allocation4], 0
    // Predicated region
    $region2: #{tpu_custom_call.1} parent=1 // pred_check
      _
    $region3: #{tpu_custom_call.1} parent=1 // pred_check_branch
      %9 = sbr.rel (0) target = $region5
    $region4: #{tpu_custom_call.1} parent=1 // pred_region
      %s11 = ssub.s32 128, 128
      %12 = vsyncadd [#allocation3], %s11
      %s14 = sshll.u32 [#allocation2], 4
      %s15 = int_to_ptr.vmem [resolvable:$true] %s14
      %17 = dma.hbm_to_vmem [thread:$0]  %s0, 128, %s15, [#allocation3]
    $region5: #{tpu_custom_call.1} parent=1 // pred_fallthru
      _
    // Predicated region
    $region6: #{tpu_custom_call.1} parent=1 // pred_check
      _
    $region7: #{tpu_custom_call.1} parent=1 // pred_check_branch
      %19 = sbr.rel (0) target = $region9
    $region8: #{tpu_custom_call.1} parent=1 // pred_region
      %20 = dma.done [#allocation3], 128
    $region9: #{tpu_custom_call.1} parent=1 // pred_fallthru
      _
    %v21 = vld [vmem:[#allocation2] sm:$0xff]
    %22 = vrot.lane.b32.xlu0 %v21, 1
    %v23 = vpop.permute.xlu0 %22
    %24 = vst [vmem:[#allocation5] sm:$0xff] %v23
    // Predicated region
    $region10: #{tpu_custom_call.1} parent=1 // pred_check
      _
    $region11: #{tpu_custom_call.1} parent=1 // pred_check_branch
      %26 = sbr.rel (0) target = $region13
    $region12: #{tpu_custom_call.1} parent=1 // pred_region
      %s28 = ssub.s32 128, 128
      %29 = vsyncadd [#allocation4], %s28
      %s31 = sshll.u32 [#allocation5], 4
      %s32 = int_to_ptr.vmem [resolvable:$true] %s31
      %34 = dma.vmem_to_hbm [thread:$0]  %s32, 128, %s1, [#allocation4]
    $region13: #{tpu_custom_call.1} parent=1 // pred_fallthru
      _
    // Predicated region
    $region14: #{tpu_custom_call.1} parent=1 // pred_check
      _
    $region15: #{tpu_custom_call.1} parent=1 // pred_check_branch
      %36 = sbr.rel (0) target = $region17
    $region16: #{tpu_custom_call.1} parent=1 // pred_region
      %37 = dma.done [#allocation4], 128
    $region17: #{tpu_custom_call.1} parent=1 // pred_fallthru
      _
    %38 = vsyncpa [#allocation3], 1
    %39 = vsyncpa [#allocation4], 1

</llo_original>
